<compile_context>
chip_gen: v7x
topology: tpu7x:2x2x1
jax: 0.10.0
libtpu: 0.0.40
codegen_flags: <defaults>
</compile_context>

<pallas_src>
import functools

import jax
import jax.numpy as jnp
from jax.experimental import pallas as pl
from jax.experimental.pallas import tpu as pltpu

_SUB = 16  # sublane extent per block: dense for both f32 (2x(8,128)) and bf16 ((16,128))


def _round_up(a, b):
    return -(-a // b) * b


def _cdiv(a, b):
    return -(-a // b)


def _l2mae_kernel(x_ref, y_ref, o_ref, acc_ref, *, c_total):
    """x_ref/y_ref: (D, _SUB, tile_c) blocks; o_ref: (8, 128) f32; acc_ref: (_SUB, tile_c) f32."""
    i = pl.program_id(1)                       # reduction (column-tile) axis
    d = x_ref.shape[0]
    tile_c = x_ref.shape[2]

    @pl.when(i == 0)
    def _init():
        acc_ref[...] = jnp.zeros_like(acc_ref)

    # In-register upcast; D (=3) unrolled statically -> pure dense VPU work.
    diff = x_ref[0].astype(jnp.float32) - y_ref[0].astype(jnp.float32)
    sq = diff * diff                                           # (_SUB, tile_c)
    for comp in range(1, d):
        dc = x_ref[comp].astype(jnp.float32) - y_ref[comp].astype(jnp.float32)
        sq = sq + dc * dc

    # Mask the ragged tail / clamped duplicate steps instead of padding in HBM.
    # col0 is the *logical* (unclamped) column start for this step.
    col0 = (pl.program_id(0) * pl.num_programs(1) + i) * tile_c
    lane = jax.lax.broadcasted_iota(jnp.int32, sq.shape, 1)
    sq = jnp.where(lane < (c_total - col0), sq, 0.0)

    acc_ref[...] += jnp.sqrt(sq)                               # dense EUP + dense accumulate

    @pl.when(i == pl.num_programs(1) - 1)
    def _finalize():
        # One cross-lane/sublane reduce per split, broadcast over the (8,128) block.
        o_ref[...] = jnp.full(o_ref.shape, jnp.sum(acc_ref[...]), dtype=o_ref.dtype)


def l2mae_loss(x, y, reduction="mean", *, tile_c=None, force_pallas=False):
    assert reduction in ("mean", "sum")
    assert x.shape == y.shape and x.ndim >= 1
    d = x.shape[-1]
    x2 = x.reshape(-1, d)
    y2 = y.reshape(-1, d)
    m = x2.shape[0]
    itemsize = jnp.dtype(x.dtype).itemsize

    # Fast path: the fused XLA reduction reads each operand exactly once; the Pallas
    # path may still pay one extra layout pass when its producer is not fused into the
    # pallas_call, so only switch over for large inputs.
    if not force_pallas and m * d * itemsize < (32 << 20):
        diff = x2.astype(jnp.float32) - y2.astype(jnp.float32)
        dists = jnp.sqrt(jnp.sum(diff * diff, axis=-1))
        return jnp.mean(dists) if reduction == "mean" else jnp.sum(dists)

    # ---- lane/sublane-dense layout: rows -> (_SUB sublanes) x (C lanes), D leading ----
    mp = _round_up(m, _SUB)
    if mp > m:
        # <=15 zero rows; zero rows give norm 0 (no masking needed) and the tiny pad
        # rides along with the layout transpose below (one pass, not two).
        x2 = jnp.pad(x2, ((0, mp - m), (0, 0)))
        y2 = jnp.pad(y2, ((0, mp - m), (0, 0)))
    c_total = mp // _SUB
    # (mp, d) -> (c_total, _SUB, d) is a free view; the transpose is the only layout pass
    # and may fuse into the pallas_call via allow_input_fusion when run under jit.
    xt = x2.reshape(c_total, _SUB, d).transpose(2, 1, 0)       # (D, _SUB, C)
    yt = y2.reshape(c_total, _SUB, d).transpose(2, 1, 0)

    # dtype-aware tile sizing: ~4 MiB useful bytes per input block, capped to the extent.
    if tile_c is None:
        target_block_bytes = 4 << 20
        tile_c = max(128, (target_block_bytes // (d * _SUB * itemsize)) // 128 * 128)
    tile_c = min(_round_up(tile_c, 128), _round_up(c_total, 128))

    n_tiles = _cdiv(c_total, tile_c)
    # Megacore split (v7x): only when each TensorCore gets >= 2 real tiles; shrink the
    # tile (never pad whole tiles) toward >= 4 balanced steps per split.
    n_split = 2 if n_tiles >= 4 else 1
    if n_split == 2:
        balanced = _round_up(_cdiv(c_total, 2 * max(4, n_tiles // 2)), 128)
        tile_c = max(128, min(tile_c, balanced))
        n_tiles = _cdiv(c_total, tile_c)
    steps_per_split = _cdiv(n_tiles, n_split)
    last_block = n_tiles - 1

    def in_idx(split, i):
        # Clamp so every DMA starts in bounds; the in-kernel lane mask (keyed off the
        # unclamped logical column) zeroes any repeated / out-of-range columns.
        blk = split * steps_per_split + i
        return (0, 0, jnp.minimum(blk, last_block))

    # VMEM budget: 2 inputs x 2 pipeline buffers + f32 accumulator (+ headroom).
    vmem_bytes = (2 * 2 * d * _SUB * tile_c * itemsize
                  + _SUB * tile_c * 4
                  + (1 << 20))
    vmem_limit = int(min(max(vmem_bytes, 8 << 20), 48 << 20))

    partials = pl.pallas_call(
        functools.partial(_l2mae_kernel, c_total=c_total),
        out_shape=jax.ShapeDtypeStruct((n_split * 8, 128), jnp.float32),
        grid_spec=pltpu.PrefetchScalarGridSpec(
            num_scalar_prefetch=0,
            grid=(n_split, steps_per_split),
            in_specs=[
                pl.BlockSpec((d, _SUB, tile_c), in_idx),
                pl.BlockSpec((d, _SUB, tile_c), in_idx),
            ],
            out_specs=pl.BlockSpec((8, 128), lambda split, i: (split, 0)),
            scratch_shapes=[pltpu.VMEM((_SUB, tile_c), jnp.float32)],
        ),
        compiler_params=pltpu.CompilerParams(
            dimension_semantics=("parallel", "arbitrary"),
            vmem_limit_bytes=vmem_limit,
            allow_input_fusion=[0, 1],   # let XLA fuse the layout producer into the call
        ),
    )(xt, yt)

    # Each split broadcast its partial sum over its (8, 128) output block.
    total = jnp.sum(partials[::8, 0])
    if reduction == "mean":
        total = total / jnp.float32(m)
    return total


if __name__ == "__main__":
    key = jax.random.PRNGKey(0)
    k1, k2, k3, k4 = jax.random.split(key, 4)

    # SchNet-like force tensors: N atoms x 3 components; N not a multiple of 16/128 so
    # the tiny row pad and the in-kernel lane mask are both exercised.
    N, D = 1000, 3
    pred = jax.random.normal(k1, (N, D), dtype=jnp.float32)
    target = jax.random.normal(k2, (N, D), dtype=jnp.float32)

    ref_dists = jnp.linalg.norm(pred - target, axis=-1)
    ref_mean = jnp.mean(ref_dists)
    ref_sum = jnp.sum(ref_dists)

    # 1) Pallas path, single tile, both reductions.
    out_mean = jax.block_until_ready(
        l2mae_loss(pred, target, reduction="mean", force_pallas=True))
    out_sum = jax.block_until_ready(
        l2mae_loss(pred, target, reduction="sum", force_pallas=True))
    assert jnp.allclose(out_mean, ref_mean, rtol=1e-5, atol=1e-5)
    assert jnp.allclose(out_sum, ref_sum, rtol=1e-5, atol=1e-3)

    # 2) Multi-tile reduction + balanced 2-way megacore split + masked partial tail.
    N2 = 8000
    pred2 = jax.random.normal(k3, (N2, D), dtype=jnp.float32)
    target2 = jax.random.normal(k4, (N2, D), dtype=jnp.float32)
    ref2 = jnp.mean(jnp.linalg.norm(pred2 - target2, axis=-1))
    out2 = jax.block_until_ready(
        l2mae_loss(pred2, target2, reduction="mean", tile_c=128, force_pallas=True))
    assert jnp.allclose(out2, ref2, rtol=1e-5, atol=1e-5)

    # 3) bf16 inputs: upcast happens in-register inside the kernel.
    pred_bf = pred.astype(jnp.bfloat16)
    target_bf = target.astype(jnp.bfloat16)
    out_bf = jax.block_until_ready(
        l2mae_loss(pred_bf, target_bf, reduction="mean", force_pallas=True))
    ref_bf = jnp.mean(jnp.linalg.norm(
        pred_bf.astype(jnp.float32) - target_bf.astype(jnp.float32), axis=-1))
    assert jnp.allclose(out_bf, ref_bf, rtol=2e-2, atol=2e-2)

    # 4) Small-problem fast path (plain JAX, no kernel launch).
    out_small = jax.block_until_ready(
        l2mae_loss(pred[:64], target[:64], reduction="mean"))
    ref_small = jnp.mean(jnp.linalg.norm(pred[:64] - target[:64], axis=-1))
    assert jnp.allclose(out_small, ref_small, rtol=1e-5, atol=1e-5)

    print("KERNEL_OK")
</pallas_src>

<mosaic_0001>
module attributes {stable_mosaic.version = 11 : i64} {
  func.func @_l2mae_kernel(%arg0: i32, %arg1: i32, %arg2: memref<3x16x128xf32, #tpu.memory_space<vmem>>, %arg3: memref<3x16x128xf32, #tpu.memory_space<vmem>>, %arg4: memref<8x128xf32, #tpu.memory_space<vmem>>, %arg5: memref<16x128xf32, #tpu.memory_space<vmem>>) attributes {dimension_semantics = [#tpu.dimension_semantics<parallel>, #tpu.dimension_semantics<arbitrary>], iteration_bounds = array<i64: 1, 1>, scalar_prefetch = 0 : i64, scratch_operands = 1 : i64, tpu.core_type = #tpu.core_type<tc>, window_params = [{transform_indices = @transform_0, window_bounds = array<i64: 3, 16, 128>}, {transform_indices = @transform_1, window_bounds = array<i64: 3, 16, 128>}, {transform_indices = @transform_2, window_bounds = array<i64: 8, 128>}]} {
    %c0_i32 = arith.constant 0 : i32
    %0 = arith.cmpi eq, %arg1, %c0_i32 : i32
    %1 = arith.extui %0 : i1 to i32
    %c0_i32_0 = arith.constant 0 : i32
    %2 = arith.cmpi ne, %1, %c0_i32_0 : i32
    scf.if %2 {
      %cst_22 = arith.constant 0.000000e+00 : f32
      %39 = vector.broadcast %cst_22 : f32 to vector<16x128xf32>
      %c0_23 = arith.constant 0 : index
      %c0_24 = arith.constant 0 : index
      %40 = vector.load %arg5[%c0_23, %c0_24] : memref<16x128xf32, #tpu.memory_space<vmem>>, vector<16x128xf32>
      tpu.vector_store %arg5[%c0_23, %c0_24], %39 {strides = array<i32>} : memref<16x128xf32, #tpu.memory_space<vmem>>, vector<16x128xf32>,
    } else {
    }
    %c0 = arith.constant 0 : index
    %c0_1 = arith.constant 0 : index
    %c0_2 = arith.constant 0 : index
    %3 = vector.load %arg2[%c0, %c0_1, %c0_2] : memref<3x16x128xf32, #tpu.memory_space<vmem>>, vector<1x16x128xf32>
    %4 = vector.shape_cast %3 : vector<1x16x128xf32> to vector<16x128xf32>
    %c0_3 = arith.constant 0 : index
    %c0_4 = arith.constant 0 : index
    %c0_5 = arith.constant 0 : index
    %5 = vector.load %arg3[%c0_3, %c0_4, %c0_5] : memref<3x16x128xf32, #tpu.memory_space<vmem>>, vector<1x16x128xf32>
    %6 = vector.shape_cast %5 : vector<1x16x128xf32> to vector<16x128xf32>
    %7 = arith.subf %4, %6 : vector<16x128xf32>
    %8 = arith.mulf %7, %7 : vector<16x128xf32>
    %c1 = arith.constant 1 : index
    %c0_6 = arith.constant 0 : index
    %c0_7 = arith.constant 0 : index
    %9 = vector.load %arg2[%c1, %c0_6, %c0_7] : memref<3x16x128xf32, #tpu.memory_space<vmem>>, vector<1x16x128xf32>
    %10 = vector.shape_cast %9 : vector<1x16x128xf32> to vector<16x128xf32>
    %c1_8 = arith.constant 1 : index
    %c0_9 = arith.constant 0 : index
    %c0_10 = arith.constant 0 : index
    %11 = vector.load %arg3[%c1_8, %c0_9, %c0_10] : memref<3x16x128xf32, #tpu.memory_space<vmem>>, vector<1x16x128xf32>
    %12 = vector.shape_cast %11 : vector<1x16x128xf32> to vector<16x128xf32>
    %13 = arith.subf %10, %12 : vector<16x128xf32>
    %14 = arith.mulf %13, %13 : vector<16x128xf32>
    %15 = arith.addf %8, %14 : vector<16x128xf32>
    %c2 = arith.constant 2 : index
    %c0_11 = arith.constant 0 : index
    %c0_12 = arith.constant 0 : index
    %16 = vector.load %arg2[%c2, %c0_11, %c0_12] : memref<3x16x128xf32, #tpu.memory_space<vmem>>, vector<1x16x128xf32>
    %17 = vector.shape_cast %16 : vector<1x16x128xf32> to vector<16x128xf32>
    %c2_13 = arith.constant 2 : index
    %c0_14 = arith.constant 0 : index
    %c0_15 = arith.constant 0 : index
    %18 = vector.load %arg3[%c2_13, %c0_14, %c0_15] : memref<3x16x128xf32, #tpu.memory_space<vmem>>, vector<1x16x128xf32>
    %19 = vector.shape_cast %18 : vector<1x16x128xf32> to vector<16x128xf32>
    %20 = arith.subf %17, %19 : vector<16x128xf32>
    %21 = arith.mulf %20, %20 : vector<16x128xf32>
    %22 = arith.addf %15, %21 : vector<16x128xf32>
    %c1_i32 = arith.constant 1 : i32
    %23 = arith.muli %arg0, %c1_i32 : i32
    %24 = arith.addi %23, %arg1 : i32
    %c128_i32 = arith.constant 128 : i32
    %25 = arith.muli %24, %c128_i32 : i32
    %26 = tpu.iota {dimensions = array<i32: 1>} : vector<16x128xi32>
    %c63_i32 = arith.constant 63 : i32
    %27 = arith.subi %c63_i32, %25 : i32
    %28 = vector.broadcast %27 : i32 to vector<16x128xi32>
    %29 = arith.cmpi slt, %26, %28 : vector<16x128xi32>
    %cst = arith.constant 0.000000e+00 : f32
    %30 = vector.broadcast %cst : f32 to vector<16x128xf32>
    %31 = arith.select %29, %22, %30 : vector<16x128xi1>, vector<16x128xf32>
    %c0_16 = arith.constant 0 : index
    %c0_17 = arith.constant 0 : index
    %32 = vector.load %arg5[%c0_16, %c0_17] : memref<16x128xf32, #tpu.memory_space<vmem>>, vector<16x128xf32>
    %33 = math.sqrt %31 : vector<16x128xf32>
    %34 = arith.addf %32, %33 : vector<16x128xf32>
    %c0_18 = arith.constant 0 : index
    %c0_19 = arith.constant 0 : index
    %35 = vector.load %arg5[%c0_18, %c0_19] : memref<16x128xf32, #tpu.memory_space<vmem>>, vector<16x128xf32>
    tpu.vector_store %arg5[%c0_18, %c0_19], %34 {strides = array<i32>} : memref<16x128xf32, #tpu.memory_space<vmem>>, vector<16x128xf32>,
    %c0_i32_20 = arith.constant 0 : i32
    %36 = arith.cmpi eq, %arg1, %c0_i32_20 : i32
    %37 = arith.extui %36 : i1 to i32
    %c0_i32_21 = arith.constant 0 : i32
    %38 = arith.cmpi ne, %37, %c0_i32_21 : i32
    scf.if %38 {
      %c0_22 = arith.constant 0 : index
      %c0_23 = arith.constant 0 : index
      %39 = vector.load %arg5[%c0_22, %c0_23] : memref<16x128xf32, #tpu.memory_space<vmem>>, vector<16x128xf32>
      %40 = vector.shape_cast %39 : vector<16x128xf32> to vector<1x16x128xf32>
      %cst_24 = arith.constant dense<0.000000e+00> : vector<1xf32>
      %41 = vector.multi_reduction <add>, %40, %cst_24 [1, 2] : vector<1x16x128xf32> to vector<1xf32>
      %42 = vector.shape_cast %41 : vector<1xf32> to vector<1x1x1xf32>
      %43 = vector.extract %42[0, 0, 0] : f32 from vector<1x1x1xf32>
      %44 = vector.broadcast %43 : f32 to vector<8x128xf32>
      %c0_25 = arith.constant 0 : index
      %c0_26 = arith.constant 0 : index
      %45 = vector.load %arg4[%c0_25, %c0_26] : memref<8x128xf32, #tpu.memory_space<vmem>>, vector<8x128xf32>
      tpu.vector_store %arg4[%c0_25, %c0_26], %44 {strides = array<i32>} : memref<8x128xf32, #tpu.memory_space<vmem>>, vector<8x128xf32>,
    } else {
    }
    return
  }
  func.func @transform_0(%arg0: i32, %arg1: i32) -> (i32, i32, i32) {
    %c1_i32 = arith.constant 1 : i32
    %0 = arith.muli %arg0, %c1_i32 : i32
    %1 = arith.addi %0, %arg1 : i32
    %c0_i32 = arith.constant 0 : i32
    %2 = arith.minsi %1, %c0_i32 : i32
    %c0_i32_0 = arith.constant 0 : i32
    %c0_i32_1 = arith.constant 0 : i32
    %c0_i32_2 = arith.constant 0 : i32
    return %c0_i32_0, %c0_i32_1, %2 : i32, i32, i32
  }
  func.func @transform_1(%arg0: i32, %arg1: i32) -> (i32, i32, i32) {
    %c1_i32 = arith.constant 1 : i32
    %0 = arith.muli %arg0, %c1_i32 : i32
    %1 = arith.addi %0, %arg1 : i32
    %c0_i32 = arith.constant 0 : i32
    %2 = arith.minsi %1, %c0_i32 : i32
    %c0_i32_0 = arith.constant 0 : i32
    %c0_i32_1 = arith.constant 0 : i32
    %c0_i32_2 = arith.constant 0 : i32
    return %c0_i32_0, %c0_i32_1, %2 : i32, i32, i32
  }
  func.func @transform_2(%arg0: i32, %arg1: i32) -> (i32, i32) {
    %c0_i32 = arith.constant 0 : i32
    %c0_i32_0 = arith.constant 0 : i32
    return %arg0, %c0_i32 : i32, i32
  }
}

</mosaic_0001>

<llo_original>
// kernel: tpu_custom_call.1
$region0: #{tpu_custom_call.1}
  #allocation0 [shape = 'u32[]', space=smem, size = 0x4, offset = 0x4, fixed_abs, tag = 'smem constant byte address 0x4 - core index']
  #allocation1 [shape = 'u32[144,128]{1,0:T(1,128)}', space=vmem, size = 0x12000, scoped, tag = 'internal scratch']
  #allocation2 [shape = 'f32[16,128]{1,0:T(8,128)}', space=vmem, size = 0x2000, scoped, tag = 'scratch operand']
  %s0 = inlined_call_operand.hbm [shape: f32[3,16,63], index: 0, kind: input, shape index: {}]
  %s1 = inlined_call_operand.hbm [shape: f32[3,16,63], index: 1, kind: input, shape index: {}]
  %s2 = inlined_call_operand.hbm [shape: f32[8,128], index: 2, kind: output, shape index: {}]
  %s3 = sld [smem:[#allocation0]]
  $region34: #{tpu_custom_call.1} parent=0
    _
  %s5 = ssub.s32 1, %s3
  %s6 = scalar_select 0, %s5, %s3
  $region1: #{tpu_custom_call.1} parent=0
    #allocation3 [shape = 'u8[24576]{0}', space=vmem, size = 0x6000, scoped, tag = 'input window, operand 0, single buffered']
    #allocation4 [shape = 's32[1]{0}', space=sflag, size = 0x4, scoped, tag = 'scoped memory for tpu_custom_call.1']
    #allocation5 [shape = 's32[1]{0}', space=sflag, size = 0x4, scoped, tag = 'scoped memory for tpu_custom_call.1']
    #allocation6 [shape = 'u8[24576]{0}', space=vmem, size = 0x6000, scoped, tag = 'input window, operand 1, single buffered']
    #allocation7 [shape = 's32[1]{0}', space=sflag, size = 0x4, scoped, tag = 'scoped memory for tpu_custom_call.1']
    #allocation8 [shape = 'u8[4096]{0}', space=vmem, size = 0x1000, scoped, tag = 'output window, operand 0, single buffered']
    %7 = vsyncpa [#allocation4], 0
    %8 = vsyncpa [#allocation7], 0
    %9 = vsyncpa [#allocation5], 0
    // Predicated region
    $region2: #{tpu_custom_call.1} parent=1 // pred_check
      _
    $region3: #{tpu_custom_call.1} parent=1 // pred_check_branch
      %11 = sbr.rel (0) target = $region5
    $region4: #{tpu_custom_call.1} parent=1 // pred_region
      %s12 = sadd.s32 0, 0
      %p13 = scmp.lt.s32.totalorder %s12, 0
      %s14 = scalar_select %p13, %s12, 0
      %s16 = ssub.s32 768, 768
      %17 = vsyncadd [#allocation4], %s16
      %s18 = smul.addr %s14, 128
      %s19 = scalar_lea.hbm %s0, %s18
      %s20 = sshll.u32 [#allocation3], 4
      %s21 = int_to_ptr.vmem [resolvable:$true] %s20
      %26 = dma.hbm_to_vmem [thread:$0]  %s19, 768, %s21, [#allocation4], 128, 128, 8
    $region5: #{tpu_custom_call.1} parent=1 // pred_fallthru
      _
    // Predicated region
    $region6: #{tpu_custom_call.1} parent=1 // pred_check
      _
    $region7: #{tpu_custom_call.1} parent=1 // pred_check_branch
      %28 = sbr.rel (0) target = $region9
    $region8: #{tpu_custom_call.1} parent=1 // pred_region
      %s29 = sadd.s32 0, 0
      %p30 = scmp.lt.s32.totalorder %s29, 0
      %s31 = scalar_select %p30, %s29, 0
      %s33 = ssub.s32 768, 768
      %34 = vsyncadd [#allocation7], %s33
      %s35 = smul.addr %s31, 128
      %s36 = scalar_lea.hbm %s1, %s35
      %s37 = sshll.u32 [#allocation6], 4
      %s38 = int_to_ptr.vmem [resolvable:$true] %s37
      %43 = dma.hbm_to_vmem [thread:$0]  %s36, 768, %s38, [#allocation7], 128, 128, 8
    $region9: #{tpu_custom_call.1} parent=1 // pred_fallthru
      _
    // Predicated region
    $region10: #{tpu_custom_call.1} parent=1 // pred_check
      _
    $region11: #{tpu_custom_call.1} parent=1 // pred_check_branch
      %45 = sbr.rel (0) target = $region13
    $region12: #{tpu_custom_call.1} parent=1 // pred_region
      %46 = dma.done [#allocation4], 768
    $region13: #{tpu_custom_call.1} parent=1 // pred_fallthru
      _
    // Predicated region
    $region14: #{tpu_custom_call.1} parent=1 // pred_check
      _
    $region15: #{tpu_custom_call.1} parent=1 // pred_check_branch
      %48 = sbr.rel (0) target = $region17
    $region16: #{tpu_custom_call.1} parent=1 // pred_region
      %49 = dma.done [#allocation7], 768
    $region17: #{tpu_custom_call.1} parent=1 // pred_fallthru
      _
    %s50 = sadd.s32 0, 0
    %p51 = scmp.lt.s32.totalorder %s50, 0
    %s52 = scalar_select %p51, %s50, 0
    %s53 = sadd.s32 0, 0
    %p54 = scmp.lt.s32.totalorder %s53, 0
    %s55 = scalar_select %p54, %s53, 0
    %p56 = scmp.eq.s32.totalorder 0, 0
    // Predicated region
    $region18: #{tpu_custom_call.1} parent=1 // pred_check
      %p57 = pneg %p56
    $region19: #{tpu_custom_call.1} parent=1 // pred_check_branch
      %59 = sbr.rel (%p57) target = $region21
    $region20: #{tpu_custom_call.1} parent=1 // pred_region
      %60 = vst [vmem:[#allocation2] sm:$0xff] 0.0
      %61 = vst [vmem:[#allocation2 + $0x8] sm:$0xff] 0.0
    $region21: #{tpu_custom_call.1} parent=1 // pred_fallthru
      _
    %v62 = vld [vmem:[#allocation3] sm:$0xff]
    %v63 = vld [vmem:[#allocation3 + $0x8] sm:$0xff]
    %v64 = vld [vmem:[#allocation6] sm:$0xff]
    %v65 = vld [vmem:[#allocation6 + $0x8] sm:$0xff]
    %v66 = vsub.f32 %v62, %v64
    %v67 = vsub.f32 %v63, %v65
    %v68 = vmul.f32 %v66, %v66
    %v69 = vmul.f32 %v67, %v67
    %s70 = scalar_lea.vmem [#allocation3], 16
    %v71 = vld [vmem:[%s70] sm:$0xff]
    %v72 = vld [vmem:[%s70 + $0x8] sm:$0xff]
    %s73 = scalar_lea.vmem [#allocation6], 16
    %v74 = vld [vmem:[%s73] sm:$0xff]
    %v75 = vld [vmem:[%s73 + $0x8] sm:$0xff]
    %v76 = vsub.f32 %v71, %v74
    %v77 = vsub.f32 %v72, %v75
    %v78 = vmul.f32 %v76, %v76
    %v79 = vmul.f32 %v77, %v77
    %v80 = vadd.f32 %v68, %v78
    %v81 = vadd.f32 %v69, %v79
    %s82 = scalar_lea.vmem [#allocation3], 32
    %v83 = vld [vmem:[%s82] sm:$0xff]
    %v84 = vld [vmem:[%s82 + $0x8] sm:$0xff]
    %s85 = scalar_lea.vmem [#allocation6], 32
    %v86 = vld [vmem:[%s85] sm:$0xff]
    %v87 = vld [vmem:[%s85 + $0x8] sm:$0xff]
    %v88 = vsub.f32 %v83, %v86
    %v89 = vsub.f32 %v84, %v87
    %v90 = vmul.f32 %v88, %v88
    %v91 = vmul.f32 %v89, %v89
    %v92 = vadd.f32 %v80, %v90
    %v93 = vadd.f32 %v81, %v91
    %s94 = sadd.s32 0, 0
    %s95 = smul.u32 %s94, 128
    %v96 = vlaneseq
    %v97 = vand.u32 %v96, 127
    %s98 = ssub.s32 63, %s95
    %v99 = vstv %s98
    %vm100 = vcmp.lt.s32.totalorder %v97, %v99
    %v101 = vsel %vm100, %v92, 0.0
    %v102 = vsel %vm100, %v93, 0.0
    %v103 = vld [vmem:[#allocation2] sm:$0xff]
    %v104 = vld [vmem:[#allocation2 + $0x8] sm:$0xff]
    %v105 = vrsqrt.pop %v101
    %v106 = vmul.f32 %v101, %v105
    %vm107 = vcmp.eq.f32.partialorder %v101, inf
    %v108 = vsel %vm107, %v101, %v106
    %vm109 = vcmp.eq.f32.partialorder %v101, 0.0
    %v110 = vand.u32 %v101, 2147483648
    %v111 = vsel %vm109, %v110, %v108
    %v112 = vrsqrt.pop %v102
    %v113 = vmul.f32 %v102, %v112
    %vm114 = vcmp.eq.f32.partialorder %v102, inf
    %v115 = vsel %vm114, %v102, %v113
    %vm116 = vcmp.eq.f32.partialorder %v102, 0.0
    %v117 = vand.u32 %v102, 2147483648
    %v118 = vsel %vm116, %v117, %v115
    %v119 = vadd.f32 %v103, %v111
    %v120 = vadd.f32 %v104, %v118
    %121 = vst [vmem:[#allocation2] sm:$0xff] %v119
    %122 = vst [vmem:[#allocation2 + $0x8] sm:$0xff] %v120
    // Predicated region
    $region22: #{tpu_custom_call.1} parent=1 // pred_check
      %p123 = pneg %p56
    $region23: #{tpu_custom_call.1} parent=1 // pred_check_branch
      %125 = sbr.rel (%p123) target = $region25
    $region24: #{tpu_custom_call.1} parent=1 // pred_region
      %v126 = vld [vmem:[#allocation2] sm:$0xff]
      %v127 = vld [vmem:[#allocation2 + $0x8] sm:$0xff]
      %v128 = vadd.f32 %v126, %v127
      %129 = vadd.xlane.f32.xlu0 %v128
      %v130 = vpop.xlane.xlu0 %129
      %v131 = vrot.slane %v130, 4
      %v132 = vadd.f32 %v130, %v131
      %v133 = vrot.slane %v132, 2
      %v134 = vadd.f32 %v132, %v133
      %v135 = vrot.slane %v134, 1
      %v136 = vadd.f32 %v134, %v135
      %s137 = vtos %v136
      %v138 = vstv %s137
      %139 = vst [vmem:[#allocation8] sm:$0xff] %v138
    $region25: #{tpu_custom_call.1} parent=1 // pred_fallthru
      _
    // Predicated region
    $region26: #{tpu_custom_call.1} parent=1 // pred_check
      _
    $region27: #{tpu_custom_call.1} parent=1 // pred_check_branch
      %141 = sbr.rel (0) target = $region29
    $region28: #{tpu_custom_call.1} parent=1 // pred_region
      %s143 = ssub.s32 128, 128
      %144 = vsyncadd [#allocation5], %s143
      %s146 = sshll.u32 [#allocation8], 4
      %s147 = int_to_ptr.vmem [resolvable:$true] %s146
      %149 = dma.vmem_to_hbm [thread:$0]  %s147, 128, %s2, [#allocation5]
    $region29: #{tpu_custom_call.1} parent=1 // pred_fallthru
      _
    // Predicated region
    $region30: #{tpu_custom_call.1} parent=1 // pred_check
      _
    $region31: #{tpu_custom_call.1} parent=1 // pred_check_branch
      %151 = sbr.rel (0) target = $region33
    $region32: #{tpu_custom_call.1} parent=1 // pred_region
      %152 = dma.done [#allocation5], 128
    $region33: #{tpu_custom_call.1} parent=1 // pred_fallthru
      _
    %153 = vsyncpa [#allocation4], 1
    %154 = vsyncpa [#allocation7], 1
    %155 = vsyncpa [#allocation5], 1

</llo_original>
